<compile_context>
chip_gen: v7x
topology: tpu7x:2x2x1
jax: 0.10.0
libtpu: 0.0.40
codegen_flags: <defaults>
</compile_context>

<pallas_src>
import jax
import jax.numpy as jnp
from jax.experimental import pallas as pl
from jax.experimental.pallas import tpu as pltpu

_NEG = -1e30  # finite "-inf" for padded vocab columns (avoids inf-inf NaNs in the LSE)


def _round_up(x, m):
    return (x + m - 1) // m * m


def bigram_kernel(idx_sref, tgt_sref,              # SMEM scalar prefetch: (BT_pad,) int32
                  pos_ref, tok_ref, w_ref, b_ref,  # VMEM inputs
                  logits_ref, nll_ref,             # VMEM outputs
                  emb_ref, tgtv_ref):              # VMEM scratch
    row_tile, _ = emb_ref.shape
    v_pad = logits_ref.shape[1]
    seq_len = pos_ref.shape[0]
    vocab = tok_ref.shape[0]
    base = pl.program_id(0) * row_tile

    # ---- per-row gather: emb[i] = tok_emb[idx[g]] + pos_emb[g % T]; stash target id ----
    def gather_row(i, carry):
        g = base + i
        tok_id = jnp.clip(idx_sref[g], 0, vocab - 1)   # clamp: no silent OOB reads
        tgt_id = jnp.clip(tgt_sref[g], 0, vocab - 1)
        pos_id = g % seq_len
        tok_row = tok_ref[pl.ds(tok_id, 1), :]         # (1, E) dynamic row load
        pos_row = pos_ref[pl.ds(pos_id, 1), :]         # (1, E)
        emb_ref[pl.ds(i, 1), :] = tok_row + pos_row    # f32 add (v5e-safe)
        tgtv_ref[pl.ds(i, 1), :] = jnp.full((1, 1), tgt_id, jnp.int32)
        return carry

    jax.lax.fori_loop(0, row_tile, gather_row, 0, unroll=row_tile <= 32)

    # ---- lm_head on the MXU: (row_tile, E) @ (E, Vpad) + bias, f32 accumulate ----
    logits = jnp.dot(emb_ref[...].astype(w_ref.dtype), w_ref[...],
                     preferred_element_type=jnp.float32) + b_ref[...]
    logits_ref[...] = logits

    # ---- fused cross-entropy NLL per row (padded columns already ~ -1e30) ----
    m = jnp.max(logits, axis=-1, keepdims=True)
    lse = m + jnp.log(jnp.sum(jnp.exp(logits - m), axis=-1, keepdims=True))
    lane = jax.lax.broadcasted_iota(jnp.int32, (row_tile, v_pad), 1)
    tgt_logit = jnp.sum(jnp.where(lane == tgtv_ref[...], logits, 0.0),
                        axis=-1, keepdims=True)
    nll_ref[...] = lse - tgt_logit


def bigram_forward(idx, targets, tok_emb, pos_emb, lm_w, lm_b,
                   *, compute_dtype=jnp.bfloat16, row_tile=None):
    """idx, targets: (B, T) int. Returns (logits (B,T,V) f32, scalar CE loss f32)."""
    B, T = idx.shape
    V, E = tok_emb.shape
    assert T <= pos_emb.shape[0], "sequence length exceeds positional table"
    BT = B * T

    v_pad = _round_up(V, 128)                    # lane-dense logits / weight columns
    if row_tile is None:
        row_tile = min(256, _round_up(BT, 8))    # small enough for v7x's 64 MiB VMEM
    row_tile = _round_up(row_tile, 8)
    bt_pad = _round_up(BT, row_tile)
    nblk = bt_pad // row_tile

    idx_flat = jnp.pad(idx.reshape(-1).astype(jnp.int32), (0, bt_pad - BT))
    tgt_flat = jnp.pad(targets.reshape(-1).astype(jnp.int32), (0, bt_pad - BT))

    pos = pos_emb[:T].astype(jnp.float32)                          # (T, E) untiled
    tok = tok_emb.astype(jnp.float32)                              # (V, E)
    w = jnp.pad(lm_w.astype(jnp.float32), ((0, 0), (0, v_pad - V)))
    w = w.astype(compute_dtype)                                    # bf16 MXU operand
    b = jnp.pad(lm_b.reshape(1, V).astype(jnp.float32),
                ((0, 0), (0, v_pad - V)), constant_values=_NEG)    # padded cols -> -1e30

    grid_spec = pltpu.PrefetchScalarGridSpec(
        num_scalar_prefetch=2,                    # idx_flat, tgt_flat -> SMEM
        grid=(nblk,),
        in_specs=[
            pl.BlockSpec((T, E), lambda i, idx_r, tgt_r: (0, 0)),       # pos table
            pl.BlockSpec((V, E), lambda i, idx_r, tgt_r: (0, 0)),       # tok table
            pl.BlockSpec((E, v_pad), lambda i, idx_r, tgt_r: (0, 0)),   # lm_head W
            pl.BlockSpec((1, v_pad), lambda i, idx_r, tgt_r: (0, 0)),   # lm_head bias
        ],
        out_specs=[
            pl.BlockSpec((row_tile, v_pad), lambda i, idx_r, tgt_r: (i, 0)),
            pl.BlockSpec((row_tile, 1), lambda i, idx_r, tgt_r: (i, 0)),
        ],
        scratch_shapes=[
            pltpu.VMEM((row_tile, E), jnp.float32),   # gathered embeddings
            pltpu.VMEM((row_tile, 1), jnp.int32),     # per-row target ids
        ],
    )

    # TODO(synk): add a loss-only variant that skips the (BT, Vpad) logits writeback for
    # training, and an optional precomputed (V x V) logits-table path for inference.
    logits_pad, nll = pl.pallas_call(
        bigram_kernel,
        grid_spec=grid_spec,
        out_shape=[
            jax.ShapeDtypeStruct((bt_pad, v_pad), jnp.float32),
            jax.ShapeDtypeStruct((bt_pad, 1), jnp.float32),
        ],
        compiler_params=pltpu.CompilerParams(
            dimension_semantics=("parallel",)),   # independent row blocks (v7x megacore)
    )(idx_flat, tgt_flat, pos, tok, w, b)

    logits = logits_pad[:BT, :V].reshape(B, T, V)
    loss = jnp.mean(nll[:BT, 0])
    return logits, loss


def reference_forward(idx, targets, tok_emb, pos_emb, lm_w, lm_b):
    B, T = idx.shape
    emb = tok_emb[idx] + pos_emb[jnp.arange(T)][None, :, :]
    logits = emb @ lm_w + lm_b[None, None, :]
    logits_flat = logits.reshape(B * T, -1)
    lse = jax.scipy.special.logsumexp(logits_flat, axis=-1)
    tgt_logit = jnp.take_along_axis(
        logits_flat, targets.reshape(-1, 1), axis=-1)[:, 0]
    loss = jnp.mean(lse - tgt_logit)
    return logits, loss


if __name__ == "__main__":
    # small shapes consistent with the module: vocab=64, context=8, embed=32
    vocab_size = 64
    context_size = 8
    embedding_dim = 32
    B, T = 2, 8

    key = jax.random.PRNGKey(0)
    k_tok, k_pos, k_w, k_b, k_idx, k_tgt = jax.random.split(key, 6)

    tok_emb = jax.random.normal(k_tok, (vocab_size, embedding_dim), jnp.float32)
    pos_emb = jax.random.normal(k_pos, (context_size, embedding_dim), jnp.float32)
    # nn.Linear(E, V): weight (V, E), bias (V); keep kernel-side as (E, V)
    bound = 1.0 / jnp.sqrt(embedding_dim)
    lm_w = jax.random.uniform(k_w, (embedding_dim, vocab_size), jnp.float32,
                              minval=-bound, maxval=bound)
    lm_b = jax.random.uniform(k_b, (vocab_size,), jnp.float32,
                              minval=-bound, maxval=bound)

    idx = jax.random.randint(k_idx, (B, T), 0, vocab_size, jnp.int32)
    targets = jax.random.randint(k_tgt, (B, T), 0, vocab_size, jnp.int32)

    ref_logits, ref_loss = reference_forward(idx, targets, tok_emb, pos_emb, lm_w, lm_b)

    # exact-semantics check: f32 MXU operands, multi-block grid (row_tile=8 -> grid=(2,))
    logits32, loss32 = bigram_forward(idx, targets, tok_emb, pos_emb, lm_w, lm_b,
                                      compute_dtype=jnp.float32, row_tile=8)
    jax.block_until_ready((logits32, loss32))
    assert jnp.allclose(logits32, ref_logits, atol=1e-4, rtol=1e-4)
    assert jnp.allclose(loss32, ref_loss, atol=1e-4, rtol=1e-4)

    # performance mode: bf16 MXU operands, f32 accumulate (looser tolerance vs f32 ref)
    logits_bf, loss_bf = bigram_forward(idx, targets, tok_emb, pos_emb, lm_w, lm_b,
                                        compute_dtype=jnp.bfloat16, row_tile=8)
    jax.block_until_ready((logits_bf, loss_bf))
    assert jnp.allclose(logits_bf, ref_logits, atol=5e-2, rtol=5e-2)
    assert jnp.allclose(loss_bf, ref_loss, atol=2e-2, rtol=2e-2)

    print("KERNEL_OK")
</pallas_src>

<mosaic_0001>
module attributes {stable_mosaic.version = 11 : i64} {
  func.func @bigram_kernel(%arg0: i32, %arg1: memref<16xi32, #tpu.memory_space<smem>>, %arg2: memref<16xi32, #tpu.memory_space<smem>>, %arg3: memref<8x32xf32, #tpu.memory_space<vmem>>, %arg4: memref<64x32xf32, #tpu.memory_space<vmem>>, %arg5: memref<32x128xf32, #tpu.memory_space<vmem>>, %arg6: memref<1x128xf32, #tpu.memory_space<vmem>>, %arg7: memref<8x128xf32, #tpu.memory_space<vmem>>, %arg8: memref<8x1xf32, #tpu.memory_space<vmem>>, %arg9: memref<8x32xf32, #tpu.memory_space<vmem>>, %arg10: memref<8x1xi32, #tpu.memory_space<vmem>>) attributes {dimension_semantics = [#tpu.dimension_semantics<parallel>], iteration_bounds = array<i64: 2>, scalar_prefetch = 2 : i64, scratch_operands = 2 : i64, tpu.core_type = #tpu.core_type<tc>, window_params = [{pipeline_mode = #tpu.pipeline_mode<synchronous>, transform_indices = @transform_0, window_bounds = array<i64: 8, 32>}, {pipeline_mode = #tpu.pipeline_mode<synchronous>, transform_indices = @transform_1, window_bounds = array<i64: 64, 32>}, {pipeline_mode = #tpu.pipeline_mode<synchronous>, transform_indices = @transform_2, window_bounds = array<i64: 32, 128>}, {pipeline_mode = #tpu.pipeline_mode<synchronous>, transform_indices = @transform_3, window_bounds = array<i64: 1, 128>}, {transform_indices = @transform_4, window_bounds = array<i64: 8, 128>}, {transform_indices = @transform_5, window_bounds = array<i64: 8, 1>}]} {
    %c8_i32 = arith.constant 8 : i32
    %0 = arith.muli %arg0, %c8_i32 : i32
    %c0_i32 = arith.constant 0 : i32
    %1 = arith.addi %0, %c0_i32 : i32
    %2 = arith.index_cast %1 : i32 to index
    %3 = memref.load %arg1[%2] : memref<16xi32, #tpu.memory_space<smem>>
    %c0_i32_0 = arith.constant 0 : i32
    %c63_i32 = arith.constant 63 : i32
    %4 = arith.maxsi %c0_i32_0, %3 : i32
    %5 = arith.minsi %c63_i32, %4 : i32
    %6 = arith.index_cast %1 : i32 to index
    %7 = memref.load %arg2[%6] : memref<16xi32, #tpu.memory_space<smem>>
    %c0_i32_1 = arith.constant 0 : i32
    %c63_i32_2 = arith.constant 63 : i32
    %8 = arith.maxsi %c0_i32_1, %7 : i32
    %9 = arith.minsi %c63_i32_2, %8 : i32
    %c8_i32_3 = arith.constant 8 : i32
    %c0_i32_4 = arith.constant 0 : i32
    %10 = arith.cmpi eq, %c8_i32_3, %c0_i32_4 : i32
    %c1_i32 = arith.constant 1 : i32
    %11 = arith.select %10, %c1_i32, %c8_i32_3 : i32
    %12 = arith.remsi %1, %11 : i32
    %c0_i32_5 = arith.constant 0 : i32
    %13 = arith.cmpi ne, %12, %c0_i32_5 : i32
    %c0_i32_6 = arith.constant 0 : i32
    %14 = arith.cmpi slt, %12, %c0_i32_6 : i32
    %c0_i32_7 = arith.constant 0 : i32
    %15 = arith.cmpi slt, %11, %c0_i32_7 : i32
    %16 = arith.xori %14, %15 : i1
    %17 = arith.andi %16, %13 : i1
    %18 = arith.addi %12, %11 : i32
    %19 = arith.select %17, %18, %12 : i32
    %20 = arith.index_cast %5 : i32 to index
    %c0 = arith.constant 0 : index
    %21 = vector.load %arg4[%20, %c0] : memref<64x32xf32, #tpu.memory_space<vmem>>, vector<1x32xf32>
    %22 = arith.index_cast %19 : i32 to index
    %c0_8 = arith.constant 0 : index
    %23 = vector.load %arg3[%22, %c0_8] : memref<8x32xf32, #tpu.memory_space<vmem>>, vector<1x32xf32>
    %24 = arith.addf %21, %23 : vector<1x32xf32>
    %25 = arith.index_cast %c0_i32 : i32 to index
    %c0_9 = arith.constant 0 : index
    %26 = vector.load %arg9[%25, %c0_9] : memref<8x32xf32, #tpu.memory_space<vmem>>, vector<1x32xf32>
    tpu.vector_store %arg9[%25, %c0_9], %24 {strides = array<i32>} : memref<8x32xf32, #tpu.memory_space<vmem>>, vector<1x32xf32>,
    %27 = vector.broadcast %9 : i32 to vector<1x1xi32>
    %28 = arith.index_cast %c0_i32 : i32 to index
    %c0_10 = arith.constant 0 : index
    %29 = vector.load %arg10[%28, %c0_10] : memref<8x1xi32, #tpu.memory_space<vmem>>, vector<1x1xi32>
    tpu.vector_store %arg10[%28, %c0_10], %27 {strides = array<i32>} : memref<8x1xi32, #tpu.memory_space<vmem>>, vector<1x1xi32>,
    %c1_i32_11 = arith.constant 1 : i32
    %30 = arith.addi %0, %c1_i32_11 : i32
    %31 = arith.index_cast %30 : i32 to index
    %32 = memref.load %arg1[%31] : memref<16xi32, #tpu.memory_space<smem>>
    %c0_i32_12 = arith.constant 0 : i32
    %c63_i32_13 = arith.constant 63 : i32
    %33 = arith.maxsi %c0_i32_12, %32 : i32
    %34 = arith.minsi %c63_i32_13, %33 : i32
    %35 = arith.index_cast %30 : i32 to index
    %36 = memref.load %arg2[%35] : memref<16xi32, #tpu.memory_space<smem>>
    %c0_i32_14 = arith.constant 0 : i32
    %c63_i32_15 = arith.constant 63 : i32
    %37 = arith.maxsi %c0_i32_14, %36 : i32
    %38 = arith.minsi %c63_i32_15, %37 : i32
    %c8_i32_16 = arith.constant 8 : i32
    %c0_i32_17 = arith.constant 0 : i32
    %39 = arith.cmpi eq, %c8_i32_16, %c0_i32_17 : i32
    %c1_i32_18 = arith.constant 1 : i32
    %40 = arith.select %39, %c1_i32_18, %c8_i32_16 : i32
    %41 = arith.remsi %30, %40 : i32
    %c0_i32_19 = arith.constant 0 : i32
    %42 = arith.cmpi ne, %41, %c0_i32_19 : i32
    %c0_i32_20 = arith.constant 0 : i32
    %43 = arith.cmpi slt, %41, %c0_i32_20 : i32
    %c0_i32_21 = arith.constant 0 : i32
    %44 = arith.cmpi slt, %40, %c0_i32_21 : i32
    %45 = arith.xori %43, %44 : i1
    %46 = arith.andi %45, %42 : i1
    %47 = arith.addi %41, %40 : i32
    %48 = arith.select %46, %47, %41 : i32
    %49 = arith.index_cast %34 : i32 to index
    %c0_22 = arith.constant 0 : index
    %50 = vector.load %arg4[%49, %c0_22] : memref<64x32xf32, #tpu.memory_space<vmem>>, vector<1x32xf32>
    %51 = arith.index_cast %48 : i32 to index
    %c0_23 = arith.constant 0 : index
    %52 = vector.load %arg3[%51, %c0_23] : memref<8x32xf32, #tpu.memory_space<vmem>>, vector<1x32xf32>
    %53 = arith.addf %50, %52 : vector<1x32xf32>
    %54 = arith.index_cast %c1_i32_11 : i32 to index
    %c0_24 = arith.constant 0 : index
    %55 = vector.load %arg9[%54, %c0_24] : memref<8x32xf32, #tpu.memory_space<vmem>>, vector<1x32xf32>
    tpu.vector_store %arg9[%54, %c0_24], %53 {strides = array<i32>} : memref<8x32xf32, #tpu.memory_space<vmem>>, vector<1x32xf32>,
    %56 = vector.broadcast %38 : i32 to vector<1x1xi32>
    %57 = arith.index_cast %c1_i32_11 : i32 to index
    %c0_25 = arith.constant 0 : index
    %58 = vector.load %arg10[%57, %c0_25] : memref<8x1xi32, #tpu.memory_space<vmem>>, vector<1x1xi32>
    tpu.vector_store %arg10[%57, %c0_25], %56 {strides = array<i32>} : memref<8x1xi32, #tpu.memory_space<vmem>>, vector<1x1xi32>,
    %c2_i32 = arith.constant 2 : i32
    %59 = arith.addi %0, %c2_i32 : i32
    %60 = arith.index_cast %59 : i32 to index
    %61 = memref.load %arg1[%60] : memref<16xi32, #tpu.memory_space<smem>>
    %c0_i32_26 = arith.constant 0 : i32
    %c63_i32_27 = arith.constant 63 : i32
    %62 = arith.maxsi %c0_i32_26, %61 : i32
    %63 = arith.minsi %c63_i32_27, %62 : i32
    %64 = arith.index_cast %59 : i32 to index
    %65 = memref.load %arg2[%64] : memref<16xi32, #tpu.memory_space<smem>>
    %c0_i32_28 = arith.constant 0 : i32
    %c63_i32_29 = arith.constant 63 : i32
    %66 = arith.maxsi %c0_i32_28, %65 : i32
    %67 = arith.minsi %c63_i32_29, %66 : i32
    %c8_i32_30 = arith.constant 8 : i32
    %c0_i32_31 = arith.constant 0 : i32
    %68 = arith.cmpi eq, %c8_i32_30, %c0_i32_31 : i32
    %c1_i32_32 = arith.constant 1 : i32
    %69 = arith.select %68, %c1_i32_32, %c8_i32_30 : i32
    %70 = arith.remsi %59, %69 : i32
    %c0_i32_33 = arith.constant 0 : i32
    %71 = arith.cmpi ne, %70, %c0_i32_33 : i32
    %c0_i32_34 = arith.constant 0 : i32
    %72 = arith.cmpi slt, %70, %c0_i32_34 : i32
    %c0_i32_35 = arith.constant 0 : i32
    %73 = arith.cmpi slt, %69, %c0_i32_35 : i32
    %74 = arith.xori %72, %73 : i1
    %75 = arith.andi %74, %71 : i1
    %76 = arith.addi %70, %69 : i32
    %77 = arith.select %75, %76, %70 : i32
    %78 = arith.index_cast %63 : i32 to index
    %c0_36 = arith.constant 0 : index
    %79 = vector.load %arg4[%78, %c0_36] : memref<64x32xf32, #tpu.memory_space<vmem>>, vector<1x32xf32>
    %80 = arith.index_cast %77 : i32 to index
    %c0_37 = arith.constant 0 : index
    %81 = vector.load %arg3[%80, %c0_37] : memref<8x32xf32, #tpu.memory_space<vmem>>, vector<1x32xf32>
    %82 = arith.addf %79, %81 : vector<1x32xf32>
    %83 = arith.index_cast %c2_i32 : i32 to index
    %c0_38 = arith.constant 0 : index
    %84 = vector.load %arg9[%83, %c0_38] : memref<8x32xf32, #tpu.memory_space<vmem>>, vector<1x32xf32>
    tpu.vector_store %arg9[%83, %c0_38], %82 {strides = array<i32>} : memref<8x32xf32, #tpu.memory_space<vmem>>, vector<1x32xf32>,
    %85 = vector.broadcast %67 : i32 to vector<1x1xi32>
    %86 = arith.index_cast %c2_i32 : i32 to index
    %c0_39 = arith.constant 0 : index
    %87 = vector.load %arg10[%86, %c0_39] : memref<8x1xi32, #tpu.memory_space<vmem>>, vector<1x1xi32>
    tpu.vector_store %arg10[%86, %c0_39], %85 {strides = array<i32>} : memref<8x1xi32, #tpu.memory_space<vmem>>, vector<1x1xi32>,
    %c3_i32 = arith.constant 3 : i32
    %88 = arith.addi %0, %c3_i32 : i32
    %89 = arith.index_cast %88 : i32 to index
    %90 = memref.load %arg1[%89] : memref<16xi32, #tpu.memory_space<smem>>
    %c0_i32_40 = arith.constant 0 : i32
    %c63_i32_41 = arith.constant 63 : i32
    %91 = arith.maxsi %c0_i32_40, %90 : i32
    %92 = arith.minsi %c63_i32_41, %91 : i32
    %93 = arith.index_cast %88 : i32 to index
    %94 = memref.load %arg2[%93] : memref<16xi32, #tpu.memory_space<smem>>
    %c0_i32_42 = arith.constant 0 : i32
    %c63_i32_43 = arith.constant 63 : i32
    %95 = arith.maxsi %c0_i32_42, %94 : i32
    %96 = arith.minsi %c63_i32_43, %95 : i32
    %c8_i32_44 = arith.constant 8 : i32
    %c0_i32_45 = arith.constant 0 : i32
    %97 = arith.cmpi eq, %c8_i32_44, %c0_i32_45 : i32
    %c1_i32_46 = arith.constant 1 : i32
    %98 = arith.select %97, %c1_i32_46, %c8_i32_44 : i32
    %99 = arith.remsi %88, %98 : i32
    %c0_i32_47 = arith.constant 0 : i32
    %100 = arith.cmpi ne, %99, %c0_i32_47 : i32
    %c0_i32_48 = arith.constant 0 : i32
    %101 = arith.cmpi slt, %99, %c0_i32_48 : i32
    %c0_i32_49 = arith.constant 0 : i32
    %102 = arith.cmpi slt, %98, %c0_i32_49 : i32
    %103 = arith.xori %101, %102 : i1
    %104 = arith.andi %103, %100 : i1
    %105 = arith.addi %99, %98 : i32
    %106 = arith.select %104, %105, %99 : i32
    %107 = arith.index_cast %92 : i32 to index
    %c0_50 = arith.constant 0 : index
    %108 = vector.load %arg4[%107, %c0_50] : memref<64x32xf32, #tpu.memory_space<vmem>>, vector<1x32xf32>
    %109 = arith.index_cast %106 : i32 to index
    %c0_51 = arith.constant 0 : index
    %110 = vector.load %arg3[%109, %c0_51] : memref<8x32xf32, #tpu.memory_space<vmem>>, vector<1x32xf32>
    %111 = arith.addf %108, %110 : vector<1x32xf32>
    %112 = arith.index_cast %c3_i32 : i32 to index
    %c0_52 = arith.constant 0 : index
    %113 = vector.load %arg9[%112, %c0_52] : memref<8x32xf32, #tpu.memory_space<vmem>>, vector<1x32xf32>
    tpu.vector_store %arg9[%112, %c0_52], %111 {strides = array<i32>} : memref<8x32xf32, #tpu.memory_space<vmem>>, vector<1x32xf32>,
    %114 = vector.broadcast %96 : i32 to vector<1x1xi32>
    %115 = arith.index_cast %c3_i32 : i32 to index
    %c0_53 = arith.constant 0 : index
    %116 = vector.load %arg10[%115, %c0_53] : memref<8x1xi32, #tpu.memory_space<vmem>>, vector<1x1xi32>
    tpu.vector_store %arg10[%115, %c0_53], %114 {strides = array<i32>} : memref<8x1xi32, #tpu.memory_space<vmem>>, vector<1x1xi32>,
    %c4_i32 = arith.constant 4 : i32
    %117 = arith.addi %0, %c4_i32 : i32
    %118 = arith.index_cast %117 : i32 to index
    %119 = memref.load %arg1[%118] : memref<16xi32, #tpu.memory_space<smem>>
    %c0_i32_54 = arith.constant 0 : i32
    %c63_i32_55 = arith.constant 63 : i32
    %120 = arith.maxsi %c0_i32_54, %119 : i32
    %121 = arith.minsi %c63_i32_55, %120 : i32
    %122 = arith.index_cast %117 : i32 to index
    %123 = memref.load %arg2[%122] : memref<16xi32, #tpu.memory_space<smem>>
    %c0_i32_56 = arith.constant 0 : i32
    %c63_i32_57 = arith.constant 63 : i32
    %124 = arith.maxsi %c0_i32_56, %123 : i32
    %125 = arith.minsi %c63_i32_57, %124 : i32
    %c8_i32_58 = arith.constant 8 : i32
    %c0_i32_59 = arith.constant 0 : i32
    %126 = arith.cmpi eq, %c8_i32_58, %c0_i32_59 : i32
    %c1_i32_60 = arith.constant 1 : i32
    %127 = arith.select %126, %c1_i32_60, %c8_i32_58 : i32
    %128 = arith.remsi %117, %127 : i32
    %c0_i32_61 = arith.constant 0 : i32
    %129 = arith.cmpi ne, %128, %c0_i32_61 : i32
    %c0_i32_62 = arith.constant 0 : i32
    %130 = arith.cmpi slt, %128, %c0_i32_62 : i32
    %c0_i32_63 = arith.constant 0 : i32
    %131 = arith.cmpi slt, %127, %c0_i32_63 : i32
    %132 = arith.xori %130, %131 : i1
    %133 = arith.andi %132, %129 : i1
    %134 = arith.addi %128, %127 : i32
    %135 = arith.select %133, %134, %128 : i32
    %136 = arith.index_cast %121 : i32 to index
    %c0_64 = arith.constant 0 : index
    %137 = vector.load %arg4[%136, %c0_64] : memref<64x32xf32, #tpu.memory_space<vmem>>, vector<1x32xf32>
    %138 = arith.index_cast %135 : i32 to index
    %c0_65 = arith.constant 0 : index
    %139 = vector.load %arg3[%138, %c0_65] : memref<8x32xf32, #tpu.memory_space<vmem>>, vector<1x32xf32>
    %140 = arith.addf %137, %139 : vector<1x32xf32>
    %141 = arith.index_cast %c4_i32 : i32 to index
    %c0_66 = arith.constant 0 : index
    %142 = vector.load %arg9[%141, %c0_66] : memref<8x32xf32, #tpu.memory_space<vmem>>, vector<1x32xf32>
    tpu.vector_store %arg9[%141, %c0_66], %140 {strides = array<i32>} : memref<8x32xf32, #tpu.memory_space<vmem>>, vector<1x32xf32>,
    %143 = vector.broadcast %125 : i32 to vector<1x1xi32>
    %144 = arith.index_cast %c4_i32 : i32 to index
    %c0_67 = arith.constant 0 : index
    %145 = vector.load %arg10[%144, %c0_67] : memref<8x1xi32, #tpu.memory_space<vmem>>, vector<1x1xi32>
    tpu.vector_store %arg10[%144, %c0_67], %143 {strides = array<i32>} : memref<8x1xi32, #tpu.memory_space<vmem>>, vector<1x1xi32>,
    %c5_i32 = arith.constant 5 : i32
    %146 = arith.addi %0, %c5_i32 : i32
    %147 = arith.index_cast %146 : i32 to index
    %148 = memref.load %arg1[%147] : memref<16xi32, #tpu.memory_space<smem>>
    %c0_i32_68 = arith.constant 0 : i32
    %c63_i32_69 = arith.constant 63 : i32
    %149 = arith.maxsi %c0_i32_68, %148 : i32
    %150 = arith.minsi %c63_i32_69, %149 : i32
    %151 = arith.index_cast %146 : i32 to index
    %152 = memref.load %arg2[%151] : memref<16xi32, #tpu.memory_space<smem>>
    %c0_i32_70 = arith.constant 0 : i32
    %c63_i32_71 = arith.constant 63 : i32
    %153 = arith.maxsi %c0_i32_70, %152 : i32
    %154 = arith.minsi %c63_i32_71, %153 : i32
    %c8_i32_72 = arith.constant 8 : i32
    %c0_i32_73 = arith.constant 0 : i32
    %155 = arith.cmpi eq, %c8_i32_72, %c0_i32_73 : i32
    %c1_i32_74 = arith.constant 1 : i32
    %156 = arith.select %155, %c1_i32_74, %c8_i32_72 : i32
    %157 = arith.remsi %146, %156 : i32
    %c0_i32_75 = arith.constant 0 : i32
    %158 = arith.cmpi ne, %157, %c0_i32_75 : i32
    %c0_i32_76 = arith.constant 0 : i32
    %159 = arith.cmpi slt, %157, %c0_i32_76 : i32
    %c0_i32_77 = arith.constant 0 : i32
    %160 = arith.cmpi slt, %156, %c0_i32_77 : i32
    %161 = arith.xori %159, %160 : i1
    %162 = arith.andi %161, %158 : i1
    %163 = arith.addi %157, %156 : i32
    %164 = arith.select %162, %163, %157 : i32
    %165 = arith.index_cast %150 : i32 to index
    %c0_78 = arith.constant 0 : index
    %166 = vector.load %arg4[%165, %c0_78] : memref<64x32xf32, #tpu.memory_space<vmem>>, vector<1x32xf32>
    %167 = arith.index_cast %164 : i32 to index
    %c0_79 = arith.constant 0 : index
    %168 = vector.load %arg3[%167, %c0_79] : memref<8x32xf32, #tpu.memory_space<vmem>>, vector<1x32xf32>
    %169 = arith.addf %166, %168 : vector<1x32xf32>
    %170 = arith.index_cast %c5_i32 : i32 to index
    %c0_80 = arith.constant 0 : index
    %171 = vector.load %arg9[%170, %c0_80] : memref<8x32xf32, #tpu.memory_space<vmem>>, vector<1x32xf32>
    tpu.vector_store %arg9[%170, %c0_80], %169 {strides = array<i32>} : memref<8x32xf32, #tpu.memory_space<vmem>>, vector<1x32xf32>,
    %172 = vector.broadcast %154 : i32 to vector<1x1xi32>
    %173 = arith.index_cast %c5_i32 : i32 to index
    %c0_81 = arith.constant 0 : index
    %174 = vector.load %arg10[%173, %c0_81] : memref<8x1xi32, #tpu.memory_space<vmem>>, vector<1x1xi32>
    tpu.vector_store %arg10[%173, %c0_81], %172 {strides = array<i32>} : memref<8x1xi32, #tpu.memory_space<vmem>>, vector<1x1xi32>,
    %c6_i32 = arith.constant 6 : i32
    %175 = arith.addi %0, %c6_i32 : i32
    %176 = arith.index_cast %175 : i32 to index
    %177 = memref.load %arg1[%176] : memref<16xi32, #tpu.memory_space<smem>>
    %c0_i32_82 = arith.constant 0 : i32
    %c63_i32_83 = arith.constant 63 : i32
    %178 = arith.maxsi %c0_i32_82, %177 : i32
    %179 = arith.minsi %c63_i32_83, %178 : i32
    %180 = arith.index_cast %175 : i32 to index
    %181 = memref.load %arg2[%180] : memref<16xi32, #tpu.memory_space<smem>>
    %c0_i32_84 = arith.constant 0 : i32
    %c63_i32_85 = arith.constant 63 : i32
    %182 = arith.maxsi %c0_i32_84, %181 : i32
    %183 = arith.minsi %c63_i32_85, %182 : i32
    %c8_i32_86 = arith.constant 8 : i32
    %c0_i32_87 = arith.constant 0 : i32
    %184 = arith.cmpi eq, %c8_i32_86, %c0_i32_87 : i32
    %c1_i32_88 = arith.constant 1 : i32
    %185 = arith.select %184, %c1_i32_88, %c8_i32_86 : i32
    %186 = arith.remsi %175, %185 : i32
    %c0_i32_89 = arith.constant 0 : i32
    %187 = arith.cmpi ne, %186, %c0_i32_89 : i32
    %c0_i32_90 = arith.constant 0 : i32
    %188 = arith.cmpi slt, %186, %c0_i32_90 : i32
    %c0_i32_91 = arith.constant 0 : i32
    %189 = arith.cmpi slt, %185, %c0_i32_91 : i32
    %190 = arith.xori %188, %189 : i1
    %191 = arith.andi %190, %187 : i1
    %192 = arith.addi %186, %185 : i32
    %193 = arith.select %191, %192, %186 : i32
    %194 = arith.index_cast %179 : i32 to index
    %c0_92 = arith.constant 0 : index
    %195 = vector.load %arg4[%194, %c0_92] : memref<64x32xf32, #tpu.memory_space<vmem>>, vector<1x32xf32>
    %196 = arith.index_cast %193 : i32 to index
    %c0_93 = arith.constant 0 : index
    %197 = vector.load %arg3[%196, %c0_93] : memref<8x32xf32, #tpu.memory_space<vmem>>, vector<1x32xf32>
    %198 = arith.addf %195, %197 : vector<1x32xf32>
    %199 = arith.index_cast %c6_i32 : i32 to index
    %c0_94 = arith.constant 0 : index
    %200 = vector.load %arg9[%199, %c0_94] : memref<8x32xf32, #tpu.memory_space<vmem>>, vector<1x32xf32>
    tpu.vector_store %arg9[%199, %c0_94], %198 {strides = array<i32>} : memref<8x32xf32, #tpu.memory_space<vmem>>, vector<1x32xf32>,
    %201 = vector.broadcast %183 : i32 to vector<1x1xi32>
    %202 = arith.index_cast %c6_i32 : i32 to index
    %c0_95 = arith.constant 0 : index
    %203 = vector.load %arg10[%202, %c0_95] : memref<8x1xi32, #tpu.memory_space<vmem>>, vector<1x1xi32>
    tpu.vector_store %arg10[%202, %c0_95], %201 {strides = array<i32>} : memref<8x1xi32, #tpu.memory_space<vmem>>, vector<1x1xi32>,
    %c7_i32 = arith.constant 7 : i32
    %204 = arith.addi %0, %c7_i32 : i32
    %205 = arith.index_cast %204 : i32 to index
    %206 = memref.load %arg1[%205] : memref<16xi32, #tpu.memory_space<smem>>
    %c0_i32_96 = arith.constant 0 : i32
    %c63_i32_97 = arith.constant 63 : i32
    %207 = arith.maxsi %c0_i32_96, %206 : i32
    %208 = arith.minsi %c63_i32_97, %207 : i32
    %209 = arith.index_cast %204 : i32 to index
    %210 = memref.load %arg2[%209] : memref<16xi32, #tpu.memory_space<smem>>
    %c0_i32_98 = arith.constant 0 : i32
    %c63_i32_99 = arith.constant 63 : i32
    %211 = arith.maxsi %c0_i32_98, %210 : i32
    %212 = arith.minsi %c63_i32_99, %211 : i32
    %c8_i32_100 = arith.constant 8 : i32
    %c0_i32_101 = arith.constant 0 : i32
    %213 = arith.cmpi eq, %c8_i32_100, %c0_i32_101 : i32
    %c1_i32_102 = arith.constant 1 : i32
    %214 = arith.select %213, %c1_i32_102, %c8_i32_100 : i32
    %215 = arith.remsi %204, %214 : i32
    %c0_i32_103 = arith.constant 0 : i32
    %216 = arith.cmpi ne, %215, %c0_i32_103 : i32
    %c0_i32_104 = arith.constant 0 : i32
    %217 = arith.cmpi slt, %215, %c0_i32_104 : i32
    %c0_i32_105 = arith.constant 0 : i32
    %218 = arith.cmpi slt, %214, %c0_i32_105 : i32
    %219 = arith.xori %217, %218 : i1
    %220 = arith.andi %219, %216 : i1
    %221 = arith.addi %215, %214 : i32
    %222 = arith.select %220, %221, %215 : i32
    %223 = arith.index_cast %208 : i32 to index
    %c0_106 = arith.constant 0 : index
    %224 = vector.load %arg4[%223, %c0_106] : memref<64x32xf32, #tpu.memory_space<vmem>>, vector<1x32xf32>
    %225 = arith.index_cast %222 : i32 to index
    %c0_107 = arith.constant 0 : index
    %226 = vector.load %arg3[%225, %c0_107] : memref<8x32xf32, #tpu.memory_space<vmem>>, vector<1x32xf32>
    %227 = arith.addf %224, %226 : vector<1x32xf32>
    %228 = arith.index_cast %c7_i32 : i32 to index
    %c0_108 = arith.constant 0 : index
    %229 = vector.load %arg9[%228, %c0_108] : memref<8x32xf32, #tpu.memory_space<vmem>>, vector<1x32xf32>
    tpu.vector_store %arg9[%228, %c0_108], %227 {strides = array<i32>} : memref<8x32xf32, #tpu.memory_space<vmem>>, vector<1x32xf32>,
    %230 = vector.broadcast %212 : i32 to vector<1x1xi32>
    %231 = arith.index_cast %c7_i32 : i32 to index
    %c0_109 = arith.constant 0 : index
    %232 = vector.load %arg10[%231, %c0_109] : memref<8x1xi32, #tpu.memory_space<vmem>>, vector<1x1xi32>
    tpu.vector_store %arg10[%231, %c0_109], %230 {strides = array<i32>} : memref<8x1xi32, #tpu.memory_space<vmem>>, vector<1x1xi32>,
    %c8_i32_110 = arith.constant 8 : i32
    %c0_111 = arith.constant 0 : index
    %c0_112 = arith.constant 0 : index
    %233 = vector.load %arg9[%c0_111, %c0_112] : memref<8x32xf32, #tpu.memory_space<vmem>>, vector<8x32xf32>
    %c0_113 = arith.constant 0 : index
    %c0_114 = arith.constant 0 : index
    %234 = vector.load %arg5[%c0_113, %c0_114] : memref<32x128xf32, #tpu.memory_space<vmem>>, vector<32x128xf32>
    %cst = arith.constant dense<0.000000e+00> : vector<8x128xf32>
    %235 = tpu.matmul %233, %234, %cst {dimension_numbers = #tpu.dot_dimension_numbers<[1], [0], [0], [1], [0, 0, 1, 1], [], []>} : vector<8x32xf32>, vector<32x128xf32>, vector<8x128xf32> -> vector<8x128xf32>
    %c0_115 = arith.constant 0 : index
    %c0_116 = arith.constant 0 : index
    %236 = vector.load %arg6[%c0_115, %c0_116] : memref<1x128xf32, #tpu.memory_space<vmem>>, vector<1x128xf32>
    %237 = vector.broadcast %236 : vector<1x128xf32> to vector<8x128xf32>
    %238 = arith.addf %235, %237 : vector<8x128xf32>
    %c0_117 = arith.constant 0 : index
    %c0_118 = arith.constant 0 : index
    %239 = vector.load %arg7[%c0_117, %c0_118] : memref<8x128xf32, #tpu.memory_space<vmem>>, vector<8x128xf32>
    tpu.vector_store %arg7[%c0_117, %c0_118], %238 {strides = array<i32>} : memref<8x128xf32, #tpu.memory_space<vmem>>, vector<8x128xf32>,
    %cst_119 = arith.constant dense<0xFF800000> : vector<8xf32>
    %240 = vector.multi_reduction <maximumf>, %238, %cst_119 [1] : vector<8x128xf32> to vector<8xf32>
    %241 = vector.shape_cast %240 : vector<8xf32> to vector<8x1xf32>
    %242 = vector.broadcast %241 : vector<8x1xf32> to vector<8x128xf32>
    %243 = arith.subf %238, %242 : vector<8x128xf32>
    %244 = math.exp %243 : vector<8x128xf32>
    %cst_120 = arith.constant dense<0.000000e+00> : vector<8xf32>
    %245 = vector.multi_reduction <add>, %244, %cst_120 [1] : vector<8x128xf32> to vector<8xf32>
    %246 = vector.shape_cast %245 : vector<8xf32> to vector<8x1xf32>
    %247 = math.log %246 : vector<8x1xf32>
    %248 = arith.addf %241, %247 : vector<8x1xf32>
    %249 = tpu.iota {dimensions = array<i32: 1>} : vector<8x128xi32>
    %c0_121 = arith.constant 0 : index
    %c0_122 = arith.constant 0 : index
    %250 = vector.load %arg10[%c0_121, %c0_122] : memref<8x1xi32, #tpu.memory_space<vmem>>, vector<8x1xi32>
    %251 = vector.broadcast %250 : vector<8x1xi32> to vector<8x128xi32>
    %252 = arith.cmpi eq, %249, %251 : vector<8x128xi32>
    %cst_123 = arith.constant 0.000000e+00 : f32
    %253 = vector.broadcast %cst_123 : f32 to vector<8x128xf32>
    %254 = arith.select %252, %238, %253 : vector<8x128xi1>, vector<8x128xf32>
    %cst_124 = arith.constant dense<0.000000e+00> : vector<8xf32>
    %255 = vector.multi_reduction <add>, %254, %cst_124 [1] : vector<8x128xf32> to vector<8xf32>
    %256 = vector.shape_cast %255 : vector<8xf32> to vector<8x1xf32>
    %257 = arith.subf %248, %256 : vector<8x1xf32>
    %c0_125 = arith.constant 0 : index
    %c0_126 = arith.constant 0 : index
    %258 = vector.load %arg8[%c0_125, %c0_126] : memref<8x1xf32, #tpu.memory_space<vmem>>, vector<8x1xf32>
    tpu.vector_store %arg8[%c0_125, %c0_126], %257 {strides = array<i32>} : memref<8x1xf32, #tpu.memory_space<vmem>>, vector<8x1xf32>,
    return
  }
  func.func @transform_0(%arg0: i32, %arg1: memref<16xi32, #tpu.memory_space<smem>>, %arg2: memref<16xi32, #tpu.memory_space<smem>>) -> (i32, i32) {
    %c0_i32 = arith.constant 0 : i32
    %c0_i32_0 = arith.constant 0 : i32
    %c0_i32_1 = arith.constant 0 : i32
    return %c0_i32, %c0_i32_0 : i32, i32
  }
  func.func @transform_1(%arg0: i32, %arg1: memref<16xi32, #tpu.memory_space<smem>>, %arg2: memref<16xi32, #tpu.memory_space<smem>>) -> (i32, i32) {
    %c0_i32 = arith.constant 0 : i32
    %c0_i32_0 = arith.constant 0 : i32
    %c0_i32_1 = arith.constant 0 : i32
    return %c0_i32, %c0_i32_0 : i32, i32
  }
  func.func @transform_2(%arg0: i32, %arg1: memref<16xi32, #tpu.memory_space<smem>>, %arg2: memref<16xi32, #tpu.memory_space<smem>>) -> (i32, i32) {
    %c0_i32 = arith.constant 0 : i32
    %c0_i32_0 = arith.constant 0 : i32
    %c0_i32_1 = arith.constant 0 : i32
    return %c0_i32, %c0_i32_0 : i32, i32
  }
  func.func @transform_3(%arg0: i32, %arg1: memref<16xi32, #tpu.memory_space<smem>>, %arg2: memref<16xi32, #tpu.memory_space<smem>>) -> (i32, i32) {
    %c0_i32 = arith.constant 0 : i32
    %c0_i32_0 = arith.constant 0 : i32
    %c0_i32_1 = arith.constant 0 : i32
    return %c0_i32, %c0_i32_0 : i32, i32
  }
  func.func @transform_4(%arg0: i32, %arg1: memref<16xi32, #tpu.memory_space<smem>>, %arg2: memref<16xi32, #tpu.memory_space<smem>>) -> (i32, i32) {
    %c0_i32 = arith.constant 0 : i32
    %c0_i32_0 = arith.constant 0 : i32
    return %arg0, %c0_i32 : i32, i32
  }
  func.func @transform_5(%arg0: i32, %arg1: memref<16xi32, #tpu.memory_space<smem>>, %arg2: memref<16xi32, #tpu.memory_space<smem>>) -> (i32, i32) {
    %c0_i32 = arith.constant 0 : i32
    %c0_i32_0 = arith.constant 0 : i32
    return %arg0, %c0_i32 : i32, i32
  }
}

</mosaic_0001>

<llo_original>
// kernel: tpu_custom_call.1
$region0: #{tpu_custom_call.1}
  #allocation0 [shape = 'u32[]', space=smem, size = 0x4, offset = 0x4, fixed_abs, tag = 'smem constant byte address 0x4 - core index']
  #allocation1 [shape = 'u32[144,128]{1,0:T(1,128)}', space=vmem, size = 0x12000, scoped, tag = 'internal scratch']
  #allocation2 [shape = 'f32[8,32]{1,0:T(8,128)}', space=vmem, size = 0x1000, scoped, tag = 'scratch operand']
  #allocation3 [shape = 's32[8,1]{1,0:T(8,128)}', space=vmem, size = 0x1000, scoped, tag = 'scratch operand']
  #allocation4 [shape = 's32[1]{0}', space=sflag, size = 0x4, scoped, tag = 'scoped memory for tpu_custom_call.1']
  #allocation5 [shape = 'u8[512]{0}', space=smem, size = 0x200, scoped, tag = 'prefetched SMEM operand 0']
  #allocation6 [shape = 'u8[512]{0}', space=smem, size = 0x200, scoped, tag = 'prefetched SMEM operand 1']
  %s0 = inlined_call_operand.vmem [shape: s32[16], index: 0, kind: input, shape index: {}]
  %s1 = inlined_call_operand.vmem [shape: s32[16], index: 1, kind: input, shape index: {}]
  %s2 = inlined_call_operand.vmem [shape: f32[8,32], index: 2, kind: input, shape index: {}]
  %s3 = inlined_call_operand.vmem [shape: f32[64,32], index: 3, kind: input, shape index: {}]
  %s4 = inlined_call_operand.vmem [shape: f32[32,128], index: 4, kind: input, shape index: {}]
  %s5 = inlined_call_operand.vmem [shape: f32[1,128], index: 5, kind: input, shape index: {}]
  %s6 = inlined_call_operand.hbm [shape: f32[16,128], index: 6, kind: output, shape index: {0}]
  %s7 = inlined_call_operand.vmem [shape: f32[16,1], index: 7, kind: output, shape index: {1}]
  %8 = xla_tuple %s6, %s7
  %s9 = sld [smem:[#allocation0]]
  $region57: #{tpu_custom_call.1} parent=0
    _
  %s11 = ssub.s32 1, %s9
  %s12 = scalar_select 0, %s11, %s9
  %s13 = sshll.u32 %s0, 4
  %s14 = int_to_ptr.vmem [resolvable:$true] %s13
  %16 = dma.vmem_to_smem %s14, 16, [#allocation5], [#allocation4]
  %s17 = sshll.u32 %s1, 4
  %s18 = int_to_ptr.vmem [resolvable:$true] %s17
  %20 = dma.vmem_to_smem %s18, 16, [#allocation6], [#allocation4]
  %21 = dma.done [#allocation4], 32
  %22 = sfence
  $region1: #{tpu_custom_call.1} parent=0
    #allocation7 [shape = 'u8[8192]{0}', space=vmem, size = 0x2000, scoped, tag = 'output window, operand 0']
    #allocation8 [shape = 's32[2]{0}', space=sflag, size = 0x8, scoped, tag = 'scoped memory for tpu_custom_call.1']
    %23 = vsyncpa [#allocation8], 0
    %s24 = scalar_lea.sflag [#allocation8], 1
    %25 = vsyncpa %s24, 0
    loop: start=0, step=1, limit=4
    $region2: #{tpu_custom_call.1} parent=1 // loop_pre_header
      _
    $region3: #{tpu_custom_call.1} parent=1 // loop_header
      %s27 = sphi 0, %s31
      %p28 = scmp.ge.s32.totalorder %s27, 4
      %s35 = sphi 0, %s35
      %s37 = sphi 0, %s35
      %s38 = sphi 0, %s37
      %s52 = sphi 0, %s38
      %s56 = sphi 0, %s56
      %s58 = sphi 0, %s56
      %s59 = sphi 0, %s58
      %s73 = sphi 0, %s59
      %s77 = sphi 0, %s77
      %s79 = sphi 0, %s77
      %s80 = sphi 0, %s79
      %s94 = sphi 0, %s80
      %s98 = sphi 0, %s98
      %s100 = sphi 0, %s98
      %s101 = sphi 0, %s100
      %s115 = sphi 0, %s101
      %s121 = sphi 0, %s123
      %s124 = sphi 0, %s121
      %s125 = sphi 0, %s124
      %s141 = sphi 0, %s125
      %s147 = sphi 0, %s149
      %s150 = sphi 0, %s147
      %s151 = sphi 0, %s150
      %s167 = sphi 0, %s151
    $region4: #{tpu_custom_call.1} parent=1 // loop_header_branch
      %30 = sbr.rel (%p28) target = $region8
    $region5: #{tpu_custom_call.1} parent=1 // loop_body
      %s32 = ssub.s32 %s27, 1
      %s33 = ssub.s32 %s27, 2
      %s34 = sadd.s32 %s27, 1
      %s36 = sadd.s32 %s35, 1
      %p39 = scmp.eq.s32.totalorder %s27, 1
      %p40 = scmp.ne.s32.totalorder %s35, %s37
      %p41 = scmp.eq.s32.totalorder %s27, 0
      %p42 = por %p40, %p41
      %p43 = scmp.ne.s32.totalorder %s35, %s37
      %p44 = scmp.eq.s32.totalorder %s32, 1
      %p45 = por %p43, %p44
      %p46 = scmp.ne.s32.totalorder %s37, %s38
      %p47 = scmp.eq.s32.totalorder %s32, 0
      %p48 = por %p46, %p47
      %p49 = scmp.ne.s32.totalorder %s37, %s38
      %p50 = scmp.eq.s32.totalorder %s33, 1
      %p51 = por %p49, %p50
      %p53 = scmp.ne.s32.totalorder %s38, %s52
      %p54 = scmp.eq.s32.totalorder %s33, 0
      %p55 = por %p53, %p54
      %s57 = sadd.s32 %s56, 1
      %p60 = scmp.eq.s32.totalorder %s27, 1
      %p61 = scmp.ne.s32.totalorder %s56, %s58
      %p62 = scmp.eq.s32.totalorder %s27, 0
      %p63 = por %p61, %p62
      %p64 = scmp.ne.s32.totalorder %s56, %s58
      %p65 = scmp.eq.s32.totalorder %s32, 1
      %p66 = por %p64, %p65
      %p67 = scmp.ne.s32.totalorder %s58, %s59
      %p68 = scmp.eq.s32.totalorder %s32, 0
      %p69 = por %p67, %p68
      %p70 = scmp.ne.s32.totalorder %s58, %s59
      %p71 = scmp.eq.s32.totalorder %s33, 1
      %p72 = por %p70, %p71
      %p74 = scmp.ne.s32.totalorder %s59, %s73
      %p75 = scmp.eq.s32.totalorder %s33, 0
      %p76 = por %p74, %p75
      %s78 = sadd.s32 %s77, 1
      %p81 = scmp.eq.s32.totalorder %s27, 1
      %p82 = scmp.ne.s32.totalorder %s77, %s79
      %p83 = scmp.eq.s32.totalorder %s27, 0
      %p84 = por %p82, %p83
      %p85 = scmp.ne.s32.totalorder %s77, %s79
      %p86 = scmp.eq.s32.totalorder %s32, 1
      %p87 = por %p85, %p86
      %p88 = scmp.ne.s32.totalorder %s79, %s80
      %p89 = scmp.eq.s32.totalorder %s32, 0
      %p90 = por %p88, %p89
      %p91 = scmp.ne.s32.totalorder %s79, %s80
      %p92 = scmp.eq.s32.totalorder %s33, 1
      %p93 = por %p91, %p92
      %p95 = scmp.ne.s32.totalorder %s80, %s94
      %p96 = scmp.eq.s32.totalorder %s33, 0
      %p97 = por %p95, %p96
      %s99 = sadd.s32 %s98, 1
      %p102 = scmp.eq.s32.totalorder %s27, 1
      %p103 = scmp.ne.s32.totalorder %s98, %s100
      %p104 = scmp.eq.s32.totalorder %s27, 0
      %p105 = por %p103, %p104
      %p106 = scmp.ne.s32.totalorder %s98, %s100
      %p107 = scmp.eq.s32.totalorder %s32, 1
      %p108 = por %p106, %p107
      %p109 = scmp.ne.s32.totalorder %s100, %s101
      %p110 = scmp.eq.s32.totalorder %s32, 0
      %p111 = por %p109, %p110
      %p112 = scmp.ne.s32.totalorder %s100, %s101
      %p113 = scmp.eq.s32.totalorder %s33, 1
      %p114 = por %p112, %p113
      %p116 = scmp.ne.s32.totalorder %s101, %s115
      %p117 = scmp.eq.s32.totalorder %s33, 0
      %p118 = por %p116, %p117
      %s119 = ssub.s32 %s27, %s34
      %p120 = scmp.eq.s32.totalorder %s119, 0
      %s122 = sadd.s32 %s121, 1
      %s123 = scalar_select %p120, %s121, %s122
      %p126 = pneg %p120
      %p127 = scmp.eq.s32.totalorder %s27, 1
      %p128 = por %p126, %p127
      %p129 = scmp.ne.s32.totalorder %s121, %s124
      %p130 = scmp.eq.s32.totalorder %s27, 0
      %p131 = por %p129, %p130
      %p132 = scmp.ne.s32.totalorder %s121, %s124
      %p133 = scmp.eq.s32.totalorder %s32, 1
      %p134 = por %p132, %p133
      %p135 = scmp.ne.s32.totalorder %s124, %s125
      %p136 = scmp.eq.s32.totalorder %s32, 0
      %p137 = por %p135, %p136
      %p138 = scmp.ne.s32.totalorder %s124, %s125
      %p139 = scmp.eq.s32.totalorder %s33, 1
      %p140 = por %p138, %p139
      %p142 = scmp.ne.s32.totalorder %s125, %s141
      %p143 = scmp.eq.s32.totalorder %s33, 0
      %p144 = por %p142, %p143
      %s145 = ssub.s32 %s27, %s34
      %p146 = scmp.eq.s32.totalorder %s145, 0
      %s148 = sadd.s32 %s147, 1
      %s149 = scalar_select %p146, %s147, %s148
      %p152 = pneg %p146
      %p153 = scmp.eq.s32.totalorder %s27, 1
      %p154 = por %p152, %p153
      %p155 = scmp.ne.s32.totalorder %s147, %s150
      %p156 = scmp.eq.s32.totalorder %s27, 0
      %p157 = por %p155, %p156
      %p158 = scmp.ne.s32.totalorder %s147, %s150
      %p159 = scmp.eq.s32.totalorder %s32, 1
      %p160 = por %p158, %p159
      %p161 = scmp.ne.s32.totalorder %s150, %s151
      %p162 = scmp.eq.s32.totalorder %s32, 0
      %p163 = por %p161, %p162
      %p164 = scmp.ne.s32.totalorder %s150, %s151
      %p165 = scmp.eq.s32.totalorder %s33, 1
      %p166 = por %p164, %p165
      %p168 = scmp.ne.s32.totalorder %s151, %s167
      %p169 = scmp.eq.s32.totalorder %s33, 0
      %p170 = por %p168, %p169
      %p171 = scmp.le.s32.totalorder 1, %s27
      %p172 = scmp.lt.s32.totalorder %s27, 3
      %p173 = pnand %p171, %p172
      %p174 = pneg %p173
      // Predicated region
      $region9: #{tpu_custom_call.1} parent=5 // pred_check
        _
      $region10: #{tpu_custom_call.1} parent=5 // pred_check_branch
        %176 = sbr.rel (%p173) target = $region12
      $region11: #{tpu_custom_call.1} parent=5 // pred_region
        %s177 = ssub.s32 %s27, 1
        // Predicated region
        $region13: #{tpu_custom_call.1} parent=11 // pred_check
          %p178 = pneg %p48
        $region14: #{tpu_custom_call.1} parent=11 // pred_check_branch
          %180 = sbr.rel (%p178) target = $region16
        $region15: #{tpu_custom_call.1} parent=11 // pred_region
          _
        $region16: #{tpu_custom_call.1} parent=11 // pred_fallthru
          _
        // Predicated region
        $region17: #{tpu_custom_call.1} parent=11 // pred_check
          %p181 = pneg %p69
        $region18: #{tpu_custom_call.1} parent=11 // pred_check_branch
          %183 = sbr.rel (%p181) target = $region20
        $region19: #{tpu_custom_call.1} parent=11 // pred_region
          _
        $region20: #{tpu_custom_call.1} parent=11 // pred_fallthru
          _
        // Predicated region
        $region21: #{tpu_custom_call.1} parent=11 // pred_check
          %p184 = pneg %p90
        $region22: #{tpu_custom_call.1} parent=11 // pred_check_branch
          %186 = sbr.rel (%p184) target = $region24
        $region23: #{tpu_custom_call.1} parent=11 // pred_region
          _
        $region24: #{tpu_custom_call.1} parent=11 // pred_fallthru
          _
        // Predicated region
        $region25: #{tpu_custom_call.1} parent=11 // pred_check
          %p187 = pneg %p111
        $region26: #{tpu_custom_call.1} parent=11 // pred_check_branch
          %189 = sbr.rel (%p187) target = $region28
        $region27: #{tpu_custom_call.1} parent=11 // pred_region
          _
        $region28: #{tpu_custom_call.1} parent=11 // pred_fallthru
          _
      $region12: #{tpu_custom_call.1} parent=5 // pred_fallthru
        _
      %p190 = scmp.lt.s32.totalorder %s27, 2
      // Predicated region
      $region29: #{tpu_custom_call.1} parent=5 // pred_check
        %p191 = pneg %p190
      $region30: #{tpu_custom_call.1} parent=5 // pred_check_branch
        %193 = sbr.rel (%p191) target = $region32
      $region31: #{tpu_custom_call.1} parent=5 // pred_region
        _
      $region32: #{tpu_custom_call.1} parent=5 // pred_fallthru
        _
      %p194 = scmp.le.s32.totalorder 1, %s27
      %p195 = scmp.lt.s32.totalorder %s27, 3
      %p196 = pnand %p194, %p195
      %p197 = pneg %p196
      // Predicated region
      $region33: #{tpu_custom_call.1} parent=5 // pred_check
        _
      $region34: #{tpu_custom_call.1} parent=5 // pred_check_branch
        %199 = sbr.rel (%p196) target = $region36
      $region35: #{tpu_custom_call.1} parent=5 // pred_region
        %s200 = ssub.s32 %s27, 1
        %p201 = pneg %p48
        %p202 = pneg %p45
        %p203 = pneg %p69
        %p204 = pneg %p66
        %p205 = pneg %p90
        %p206 = pneg %p87
        %p207 = pneg %p111
        %p208 = pneg %p108
        %p209 = pneg %p137
        %p210 = pneg %p134
        %s211 = sand.u32 %s124, 1
        %s212 = scalar_lea.sflag [#allocation8], %s211
        %s213 = sand.u32 %s124, 1
        %s214 = smul.addr %s213, 8
        %s215 = scalar_lea.vmem [#allocation7], %s214
        %p216 = pneg %p163
        %p217 = pneg %p160
        %p218 = scmp.lt.s32.totalorder %s32, 1
        %s219 = scalar_select %p218, %s32, 1
        %s220 = smul.addr %s219, 8
        %s221 = scalar_lea.vmem %s7, %s220
        %p222 = scmp.lt.s32.totalorder %s32, 1
        %s223 = scalar_select %p222, %s32, 1
        %s224 = smul.addr %s223, 8
        %s225 = scalar_lea.vmem %s7, %s224
        %s226 = smul.u32 %s32, 8
        %s227 = sld [smem:[#allocation5 + %s226]]
        %p228 = scmp.gt.s32.totalorder %s227, 0
        %s229 = scalar_select %p228, %s227, 0
        %p230 = scmp.lt.s32.totalorder %s229, 63
        %s231 = scalar_select %p230, %s229, 63
        %s232 = sld [smem:[#allocation6 + %s226]]
        %p233 = scmp.gt.s32.totalorder %s232, 0
        %s234 = scalar_select %p233, %s232, 0
        %p235 = scmp.lt.s32.totalorder %s234, 63
        %s236 = scalar_select %p235, %s234, 63
        %p237 = scmp.lt.s32.totalorder %s226, 0
        %s238 = ssub.s32 0, %s226
        %s239 = scalar_select %p237, %s238, %s226
        %s240 = sand.u32 %s239, 7
        %s241 = ssub.s32 0, %s240
        %s242 = scalar_select %p237, %s241, %s240
        %p243 = scmp.ne.s32.totalorder %s242, 0
        %p244 = scmp.lt.s32.totalorder %s242, 0
        %p245 = pnand %p244, %p243
        %p246 = pneg %p245
        %s247 = sadd.s32 %s242, 8
        %s248 = scalar_select %p246, %s247, %s242
        %s249 = scalar_lea.vmem %s3, %s231
        %v250 = vld [vmem:[%s249] sm:$0x1]
        %s251 = scalar_lea.vmem %s2, %s248
        %v252 = vld [vmem:[%s251] sm:$0x1]
        %v253 = vadd.f32 %v250, %v252
        %vm254 = vcmask 253952
        %255 = vst.msk [vmem:[#allocation2] sm:$0x1] %vm254, %v253
        %v256 = vstv %s236
        %vm257 = vcmask 0
        %258 = vst.msk [vmem:[#allocation3] sm:$0x1] %vm257, %v256
        %s259 = sadd.s32 %s226, 1
        %s260 = sld [smem:[#allocation5 + %s259]]
        %p261 = scmp.gt.s32.totalorder %s260, 0
        %s262 = scalar_select %p261, %s260, 0
        %p263 = scmp.lt.s32.totalorder %s262, 63
        %s264 = scalar_select %p263, %s262, 63
        %s265 = sld [smem:[#allocation6 + %s259]]
        %p266 = scmp.gt.s32.totalorder %s265, 0
        %s267 = scalar_select %p266, %s265, 0
        %p268 = scmp.lt.s32.totalorder %s267, 63
        %s269 = scalar_select %p268, %s267, 63
        %p270 = scmp.lt.s32.totalorder %s259, 0
        %s271 = ssub.s32 0, %s259
        %s272 = scalar_select %p270, %s271, %s259
        %s273 = sand.u32 %s272, 7
        %s274 = ssub.s32 0, %s273
        %s275 = scalar_select %p270, %s274, %s273
        %p276 = scmp.ne.s32.totalorder %s275, 0
        %p277 = scmp.lt.s32.totalorder %s275, 0
        %p278 = pnand %p277, %p276
        %p279 = pneg %p278
        %s280 = sadd.s32 %s275, 8
        %s281 = scalar_select %p279, %s280, %s275
        %s282 = scalar_lea.vmem %s3, %s264
        %v283 = vld [vmem:[%s282] sm:$0x1]
        %s284 = scalar_lea.vmem %s2, %s281
        %v285 = vld [vmem:[%s284] sm:$0x1]
        %v286 = vadd.f32 %v283, %v285
        %287 = vst.msk [vmem:[#allocation2 + $0x1] sm:$0x1] %vm254, %v286
        %v288 = vstv %s269
        %289 = vst.msk [vmem:[#allocation3 + $0x1] sm:$0x1] %vm257, %v288
        %s290 = sadd.s32 %s226, 2
        %s291 = sld [smem:[#allocation5 + %s290]]
        %p292 = scmp.gt.s32.totalorder %s291, 0
        %s293 = scalar_select %p292, %s291, 0
        %p294 = scmp.lt.s32.totalorder %s293, 63
        %s295 = scalar_select %p294, %s293, 63
        %s296 = sld [smem:[#allocation6 + %s290]]
        %p297 = scmp.gt.s32.totalorder %s296, 0
        %s298 = scalar_select %p297, %s296, 0
        %p299 = scmp.lt.s32.totalorder %s298, 63
        %s300 = scalar_select %p299, %s298, 63
        %p301 = scmp.lt.s32.totalorder %s290, 0
        %s302 = ssub.s32 0, %s290
        %s303 = scalar_select %p301, %s302, %s290
        %s304 = sand.u32 %s303, 7
        %s305 = ssub.s32 0, %s304
        %s306 = scalar_select %p301, %s305, %s304
        %p307 = scmp.ne.s32.totalorder %s306, 0
        %p308 = scmp.lt.s32.totalorder %s306, 0
        %p309 = pnand %p308, %p307
        %p310 = pneg %p309
        %s311 = sadd.s32 %s306, 8
        %s312 = scalar_select %p310, %s311, %s306
        %s313 = scalar_lea.vmem %s3, %s295
        %v314 = vld [vmem:[%s313] sm:$0x1]
        %s315 = scalar_lea.vmem %s2, %s312
        %v316 = vld [vmem:[%s315] sm:$0x1]
        %v317 = vadd.f32 %v314, %v316
        %318 = vst.msk [vmem:[#allocation2 + $0x2] sm:$0x1] %vm254, %v317
        %v319 = vstv %s300
        %320 = vst.msk [vmem:[#allocation3 + $0x2] sm:$0x1] %vm257, %v319
        %s321 = sadd.s32 %s226, 3
        %s322 = sld [smem:[#allocation5 + %s321]]
        %p323 = scmp.gt.s32.totalorder %s322, 0
        %s324 = scalar_select %p323, %s322, 0
        %p325 = scmp.lt.s32.totalorder %s324, 63
        %s326 = scalar_select %p325, %s324, 63
        %s327 = sld [smem:[#allocation6 + %s321]]
        %p328 = scmp.gt.s32.totalorder %s327, 0
        %s329 = scalar_select %p328, %s327, 0
        %p330 = scmp.lt.s32.totalorder %s329, 63
        %s331 = scalar_select %p330, %s329, 63
        %p332 = scmp.lt.s32.totalorder %s321, 0
        %s333 = ssub.s32 0, %s321
        %s334 = scalar_select %p332, %s333, %s321
        %s335 = sand.u32 %s334, 7
        %s336 = ssub.s32 0, %s335
        %s337 = scalar_select %p332, %s336, %s335
        %p338 = scmp.ne.s32.totalorder %s337, 0
        %p339 = scmp.lt.s32.totalorder %s337, 0
        %p340 = pnand %p339, %p338
        %p341 = pneg %p340
        %s342 = sadd.s32 %s337, 8
        %s343 = scalar_select %p341, %s342, %s337
        %s344 = scalar_lea.vmem %s3, %s326
        %v345 = vld [vmem:[%s344] sm:$0x1]
        %s346 = scalar_lea.vmem %s2, %s343
        %v347 = vld [vmem:[%s346] sm:$0x1]
        %v348 = vadd.f32 %v345, %v347
        %349 = vst.msk [vmem:[#allocation2 + $0x3] sm:$0x1] %vm254, %v348
        %v350 = vstv %s331
        %351 = vst.msk [vmem:[#allocation3 + $0x3] sm:$0x1] %vm257, %v350
        %s352 = sadd.s32 %s226, 4
        %s353 = sld [smem:[#allocation5 + %s352]]
        %p354 = scmp.gt.s32.totalorder %s353, 0
        %s355 = scalar_select %p354, %s353, 0
        %p356 = scmp.lt.s32.totalorder %s355, 63
        %s357 = scalar_select %p356, %s355, 63
        %s358 = sld [smem:[#allocation6 + %s352]]
        %p359 = scmp.gt.s32.totalorder %s358, 0
        %s360 = scalar_select %p359, %s358, 0
        %p361 = scmp.lt.s32.totalorder %s360, 63
        %s362 = scalar_select %p361, %s360, 63
        %p363 = scmp.lt.s32.totalorder %s352, 0
        %s364 = ssub.s32 0, %s352
        %s365 = scalar_select %p363, %s364, %s352
        %s366 = sand.u32 %s365, 7
        %s367 = ssub.s32 0, %s366
        %s368 = scalar_select %p363, %s367, %s366
        %p369 = scmp.ne.s32.totalorder %s368, 0
        %p370 = scmp.lt.s32.totalorder %s368, 0
        %p371 = pnand %p370, %p369
        %p372 = pneg %p371
        %s373 = sadd.s32 %s368, 8
        %s374 = scalar_select %p372, %s373, %s368
        %s375 = scalar_lea.vmem %s3, %s357
        %v376 = vld [vmem:[%s375] sm:$0x1]
        %s377 = scalar_lea.vmem %s2, %s374
        %v378 = vld [vmem:[%s377] sm:$0x1]
        %v379 = vadd.f32 %v376, %v378
        %380 = vst.msk [vmem:[#allocation2 + $0x4] sm:$0x1] %vm254, %v379
        %v381 = vstv %s362
        %382 = vst.msk [vmem:[#allocation3 + $0x4] sm:$0x1] %vm257, %v381
        %s383 = sadd.s32 %s226, 5
        %s384 = sld [smem:[#allocation5 + %s383]]
        %p385 = scmp.gt.s32.totalorder %s384, 0
        %s386 = scalar_select %p385, %s384, 0
        %p387 = scmp.lt.s32.totalorder %s386, 63
        %s388 = scalar_select %p387, %s386, 63
        %s389 = sld [smem:[#allocation6 + %s383]]
        %p390 = scmp.gt.s32.totalorder %s389, 0
        %s391 = scalar_select %p390, %s389, 0
        %p392 = scmp.lt.s32.totalorder %s391, 63
        %s393 = scalar_select %p392, %s391, 63
        %p394 = scmp.lt.s32.totalorder %s383, 0
        %s395 = ssub.s32 0, %s383
        %s396 = scalar_select %p394, %s395, %s383
        %s397 = sand.u32 %s396, 7
        %s398 = ssub.s32 0, %s397
        %s399 = scalar_select %p394, %s398, %s397
        %p400 = scmp.ne.s32.totalorder %s399, 0
        %p401 = scmp.lt.s32.totalorder %s399, 0
        %p402 = pnand %p401, %p400
        %p403 = pneg %p402
        %s404 = sadd.s32 %s399, 8
        %s405 = scalar_select %p403, %s404, %s399
        %s406 = scalar_lea.vmem %s3, %s388
        %v407 = vld [vmem:[%s406] sm:$0x1]
        %s408 = scalar_lea.vmem %s2, %s405
        %v409 = vld [vmem:[%s408] sm:$0x1]
        %v410 = vadd.f32 %v407, %v409
        %411 = vst.msk [vmem:[#allocation2 + $0x5] sm:$0x1] %vm254, %v410
        %v412 = vstv %s393
        %413 = vst.msk [vmem:[#allocation3 + $0x5] sm:$0x1] %vm257, %v412
        %s414 = sadd.s32 %s226, 6
        %s415 = sld [smem:[#allocation5 + %s414]]
        %p416 = scmp.gt.s32.totalorder %s415, 0
        %s417 = scalar_select %p416, %s415, 0
        %p418 = scmp.lt.s32.totalorder %s417, 63
        %s419 = scalar_select %p418, %s417, 63
        %s420 = sld [smem:[#allocation6 + %s414]]
        %p421 = scmp.gt.s32.totalorder %s420, 0
        %s422 = scalar_select %p421, %s420, 0
        %p423 = scmp.lt.s32.totalorder %s422, 63
        %s424 = scalar_select %p423, %s422, 63
        %p425 = scmp.lt.s32.totalorder %s414, 0
        %s426 = ssub.s32 0, %s414
        %s427 = scalar_select %p425, %s426, %s414
        %s428 = sand.u32 %s427, 7
        %s429 = ssub.s32 0, %s428
        %s430 = scalar_select %p425, %s429, %s428
        %p431 = scmp.ne.s32.totalorder %s430, 0
        %p432 = scmp.lt.s32.totalorder %s430, 0
        %p433 = pnand %p432, %p431
        %p434 = pneg %p433
        %s435 = sadd.s32 %s430, 8
        %s436 = scalar_select %p434, %s435, %s430
        %s437 = scalar_lea.vmem %s3, %s419
        %v438 = vld [vmem:[%s437] sm:$0x1]
        %s439 = scalar_lea.vmem %s2, %s436
        %v440 = vld [vmem:[%s439] sm:$0x1]
        %v441 = vadd.f32 %v438, %v440
        %442 = vst.msk [vmem:[#allocation2 + $0x6] sm:$0x1] %vm254, %v441
        %v443 = vstv %s424
        %444 = vst.msk [vmem:[#allocation3 + $0x6] sm:$0x1] %vm257, %v443
        %s445 = sadd.s32 %s226, 7
        %s446 = sld [smem:[#allocation5 + %s445]]
        %p447 = scmp.gt.s32.totalorder %s446, 0
        %s448 = scalar_select %p447, %s446, 0
        %p449 = scmp.lt.s32.totalorder %s448, 63
        %s450 = scalar_select %p449, %s448, 63
        %s451 = sld [smem:[#allocation6 + %s445]]
        %p452 = scmp.gt.s32.totalorder %s451, 0
        %s453 = scalar_select %p452, %s451, 0
        %p454 = scmp.lt.s32.totalorder %s453, 63
        %s455 = scalar_select %p454, %s453, 63
        %p456 = scmp.lt.s32.totalorder %s445, 0
        %s457 = ssub.s32 0, %s445
        %s458 = scalar_select %p456, %s457, %s445
        %s459 = sand.u32 %s458, 7
        %s460 = ssub.s32 0, %s459
        %s461 = scalar_select %p456, %s460, %s459
        %p462 = scmp.ne.s32.totalorder %s461, 0
        %p463 = scmp.lt.s32.totalorder %s461, 0
        %p464 = pnand %p463, %p462
        %p465 = pneg %p464
        %s466 = sadd.s32 %s461, 8
        %s467 = scalar_select %p465, %s466, %s461
        %s468 = scalar_lea.vmem %s3, %s450
        %v469 = vld [vmem:[%s468] sm:$0x1]
        %s470 = scalar_lea.vmem %s2, %s467
        %v471 = vld [vmem:[%s470] sm:$0x1]
        %v472 = vadd.f32 %v469, %v471
        %473 = vst.msk [vmem:[#allocation2 + $0x7] sm:$0x1] %vm254, %v472
        %v474 = vstv %s455
        %475 = vst.msk [vmem:[#allocation3 + $0x7] sm:$0x1] %vm257, %v474
        %v476 = vld [vmem:[#allocation2] sm:$0xff]
        %v477 = vld [vmem:[%s4] sm:$0xff]
        %v478 = vld [vmem:[%s4 + $0x8] sm:$0xff]
        %v479 = vld [vmem:[%s4 + $0x10] sm:$0xff]
        %v480 = vld [vmem:[%s4 + $0x18] sm:$0xff]
        %v481 = vld [vmem:[%s5] sm:$0x1]
        %v483 = vlaneseq
        %v484 = vshrl.u32 %v483, 7
        %v485 = vsub.s32 0, %v484
        %v486 = vrot.slane %v481, %v485
        %vm488 = vcmask 261120
        %v490 = vsel %vm488, %v476, 0
        %492 = vmatprep.subr.mxu0 0.0
        %493 = vmatpush1.msra.mxu0 %v477
        %494 = vmatprep.subr.mxu0 0.0
        %495 = vmatpush1.msra.mxu0 %v478
        %496 = vmatprep.subr.mxu0 0.0
        %497 = vmatpush1.msra.mxu0 %v479
        %498 = vmatprep.subr.mxu0 0.0
        %499 = vmatpush1.msra.mxu0 %v480
        %500 = vmatprep.subr.mxu0 0.0
        %501 = vmatpush1.msra.mxu0 0.0
        %502 = vmatprep.subr.mxu0 0.0
        %503 = vmatpush1.msra.mxu0 0.0
        %504 = vmatprep.subr.mxu0 0.0
        %505 = vmatpush1.msra.mxu0 0.0
        %506 = vmatprep.subr.mxu0 0.0
        %507 = vmatpush1.msra.mxu0 0.0
        %508 = vmatprep.subr.mxu0 0.0
        %509 = vmatpush1.msra.mxu0 0.0
        %510 = vmatprep.subr.mxu0 0.0
        %511 = vmatpush1.msra.mxu0 0.0
        %512 = vmatprep.subr.mxu0 0.0
        %513 = vmatpush1.msra.mxu0 0.0
        %514 = vmatprep.subr.mxu0 0.0
        %515 = vmatpush1.msra.mxu0 0.0
        %516 = vmatprep.subr.mxu0 0.0
        %517 = vmatpush1.msra.mxu0 0.0
        %518 = vmatprep.subr.mxu0 0.0
        %519 = vmatpush1.msra.mxu0 0.0
        %520 = vmatprep.subr.mxu0 0.0
        %521 = vmatpush1.msra.mxu0 0.0
        %522 = vmatprep.subr.mxu0 0.0
        %523 = vmatpush1.msra.mxu0 0.0
        %524 = vmatprep.subr.mxu0 0.0
        %525 = vmatpush1.msra.mxu0 0.0
        %526 = vmatprep.subr.mxu0 0.0
        %527 = vmatpush1.msra.mxu0 0.0
        %528 = vmatprep.subr.mxu0 0.0
        %529 = vmatpush1.msra.mxu0 0.0
        %530 = vmatprep.subr.mxu0 0.0
        %531 = vmatpush1.msra.mxu0 0.0
        %532 = vmatprep.subr.mxu0 0.0
        %533 = vmatpush1.msra.mxu0 0.0
        %534 = vmatprep.subr.mxu0 0.0
        %535 = vmatpush1.msra.mxu0 0.0
        %536 = vmatprep.subr.mxu0 0.0
        %537 = vmatpush1.msra.mxu0 0.0
        %538 = vmatprep.subr.mxu0 0.0
        %539 = vmatpush1.msra.mxu0 0.0
        %540 = vmatprep.subr.mxu0 0.0
        %541 = vmatpush1.msra.mxu0 0.0
        %542 = vmatprep.subr.mxu0 0.0
        %543 = vmatpush1.msra.mxu0 0.0
        %544 = vmatprep.subr.mxu0 0.0
        %545 = vmatpush1.msra.mxu0 0.0
        %546 = vmatprep.subr.mxu0 0.0
        %547 = vmatpush1.msra.mxu0 0.0
        %548 = vmatprep.subr.mxu0 0.0
        %549 = vmatpush1.msra.mxu0 0.0
        %550 = vmatprep.subr.mxu0 0.0
        %551 = vmatpush1.msra.mxu0 0.0
        %552 = vmatprep.subr.mxu0 0.0
        %553 = vmatpush1.msra.mxu0 0.0
        %554 = vmatprep.subr.mxu0 0.0
        %555 = vmatpush1.msra.mxu0 0.0
        %556 = vmatprep.mubr.f32.mxu0 0.0
        %557 = vmatmul.mubr.f32.gmra.mrb[0].mxu0 %v490
        %v558 = vpop.f32.mrb[0].mxu0
        %v559 = vadd.f32 %v486, %v558
        %v560 = vpop.f32.mrb[0].mxu0
        %561 = vdwg.mxu0
        %562 = vst [vmem:[%s215] sm:$0xff] %v559
        %563 = vmax.xlane.f32.xlu0 %v559
        %v564 = vpop.xlane.xlu0 %563
        %v565 = vsub.f32 %v559, %v564
        %v566 = vmul.f32 %v565, 1.442695
        %v567 = vpow.pop %v566
        %568 = vadd.xlane.f32.xlu0 %v567
        %v569 = vpop.xlane.xlu0 %568
        %v570 = vlog2.pop %v569
        %v571 = vmul.f32 %v570, 0.6931472
        %v572 = vadd.f32 %v564, %v571
        %v573 = vlaneseq
        %v574 = vand.u32 %v573, 127
        %v575 = vld [vmem:[#allocation3] sm:$0xff]
        %576 = vset.pattern.permute.xlu0 0
        %577 = vperm.xlu0 %576, %v575
        %v578 = vpop.permute.xlu0 %577
        %vm579 = vcmp.eq.s32.totalorder %v574, %v578
        %v580 = vsel %vm579, %v559, 0.0
        %581 = vadd.xlane.f32.xlu0 %v580
        %v582 = vpop.xlane.xlu0 %581
        %v583 = vsub.f32 %v572, %v582
        %vm584 = vcmask 7168
        %585 = vst.msk [vmem:[%s225] sm:$0xff] %vm584, %v583
        %s586 = sand.u32 %s124, 1
        %s587 = scalar_lea.sflag [#allocation8], %s586
        %s588 = sand.u32 %s124, 1
        %s589 = smul.addr %s588, 8
        %s590 = scalar_lea.vmem [#allocation7], %s589
        %p591 = scmp.lt.s32.totalorder %s32, 1
        %s592 = scalar_select %p591, %s32, 1
        %s593 = smul.addr %s592, 8
        %s594 = scalar_lea.vmem %s7, %s593
        // Predicated region
        $region37: #{tpu_custom_call.1} parent=35 // pred_check
          %p595 = pneg %p134
        $region38: #{tpu_custom_call.1} parent=35 // pred_check_branch
          %597 = sbr.rel (%p595) target = $region40
        $region39: #{tpu_custom_call.1} parent=35 // pred_region
          %s599 = ssub.s32 128, 128
          %600 = vsyncadd %s587, %s599
          %s601 = smul.addr %s32, 128
          %s602 = scalar_lea.hbm %s6, %s601
          %s604 = sshll.u32 %s590, 4
          %s605 = int_to_ptr.vmem [resolvable:$true] %s604
          %607 = dma.vmem_to_hbm [thread:$0]  %s605, 128, %s602, %s587
        $region40: #{tpu_custom_call.1} parent=35 // pred_fallthru
          _
        // Predicated region
        $region41: #{tpu_custom_call.1} parent=35 // pred_check
          %p608 = pneg %p160
        $region42: #{tpu_custom_call.1} parent=35 // pred_check_branch
          %610 = sbr.rel (%p608) target = $region44
        $region43: #{tpu_custom_call.1} parent=35 // pred_region
          _
        $region44: #{tpu_custom_call.1} parent=35 // pred_fallthru
          _
      $region36: #{tpu_custom_call.1} parent=5 // pred_fallthru
        _
      %p611 = scmp.le.s32.totalorder 2, %s27
      // Predicated region
      $region45: #{tpu_custom_call.1} parent=5 // pred_check
        %p612 = pneg %p611
      $region46: #{tpu_custom_call.1} parent=5 // pred_check_branch
        %614 = sbr.rel (%p612) target = $region48
      $region47: #{tpu_custom_call.1} parent=5 // pred_region
        %s615 = ssub.s32 %s27, 2
        // Predicated region
        $region49: #{tpu_custom_call.1} parent=47 // pred_check
          %p616 = pneg %p140
        $region50: #{tpu_custom_call.1} parent=47 // pred_check_branch
          %618 = sbr.rel (%p616) target = $region52
        $region51: #{tpu_custom_call.1} parent=47 // pred_region
          %s619 = sand.u32 %s125, 1
          %s620 = scalar_lea.sflag [#allocation8], %s619
          %s621 = sand.u32 %s125, 1
          %s622 = smul.addr %s621, 8
          %s623 = scalar_lea.vmem [#allocation7], %s622
          %624 = dma.done %s620, 128
        $region52: #{tpu_custom_call.1} parent=47 // pred_fallthru
          _
        // Predicated region
        $region53: #{tpu_custom_call.1} parent=47 // pred_check
          %p625 = pneg %p166
        $region54: #{tpu_custom_call.1} parent=47 // pred_check_branch
          %627 = sbr.rel (%p625) target = $region56
        $region55: #{tpu_custom_call.1} parent=47 // pred_region
          %p628 = scmp.lt.s32.totalorder %s33, 1
          %s629 = scalar_select %p628, %s33, 1
          %s630 = smul.addr %s629, 8
          %s631 = scalar_lea.vmem %s7, %s630
        $region56: #{tpu_custom_call.1} parent=47 // pred_fallthru
          _
      $region48: #{tpu_custom_call.1} parent=5 // pred_fallthru
        _
    $region6: #{tpu_custom_call.1} parent=1 // loop_footer
      %s31 = sadd.s32 1, %s27
    $region7: #{tpu_custom_call.1} parent=1 // loop_footer_branch
      %26 = sbr.rel target = $region3
    $region8: #{tpu_custom_call.1} parent=1 // loop_exit
      _
    %632 = vsyncpa [#allocation8], 1
    %s633 = scalar_lea.sflag [#allocation8], 1
    %634 = vsyncpa %s633, 1

</llo_original>
